<compile_context>
chip_gen: v7x
topology: tpu7x:2x2x1
jax: 0.10.0
libtpu: 0.0.40
codegen_flags: <defaults>
</compile_context>

<pallas_src>
import functools
from typing import Tuple

import jax
import jax.numpy as jnp
from jax.experimental import pallas as pl
from jax.experimental.pallas import tpu as pltpu


_MAX_DMA_CHUNKS = 4            # a few concurrent HBM->HBM DMAs; enough to feed HBM
_CHUNK_THRESHOLD_BYTES = 1 << 20   # below this, one DMA descriptor is optimal


def _chunk_bounds(dim0: int, max_chunks: int) -> Tuple[Tuple[int, int], ...]:
    """Static (start, size) splits of the leading axis into <= max_chunks parts."""
    n = max(1, min(dim0, max_chunks))
    base, rem = divmod(dim0, n)
    bounds = []
    start = 0
    for i in range(n):
        size = base + (1 if i < rem else 0)
        if size > 0:
            bounds.append((start, size))
        start += size
    return tuple(bounds)


def _make_identity_dma_kernel(bounds: Tuple[Tuple[int, int], ...]):
    """HBM->HBM identity copy via concurrent leading-axis chunk DMAs."""
    def kernel(x_hbm, o_hbm, sem):
        # TODO(synk): Model_Base.forward raises NotImplementedError (no layers);
        # the only semantics-preserving base-class forward is identity.
        copies = []
        for i, (start, size) in enumerate(bounds):
            cp = pltpu.make_async_copy(
                x_hbm.at[pl.ds(start, size)],
                o_hbm.at[pl.ds(start, size)],
                sem.at[i],
            )
            cp.start()
            copies.append(cp)
        for cp in copies:
            cp.wait()
    return kernel


@functools.lru_cache(maxsize=None)
def _build_identity(shape: Tuple[int, ...], dtype_name: str, n_chunks: int):
    dtype = jnp.dtype(dtype_name)
    bounds = _chunk_bounds(shape[0], n_chunks)
    call = pl.pallas_call(
        _make_identity_dma_kernel(bounds),
        out_shape=jax.ShapeDtypeStruct(shape, dtype),
        in_specs=[pl.BlockSpec(memory_space=pl.ANY)],
        out_specs=pl.BlockSpec(memory_space=pl.ANY),
        scratch_shapes=[pltpu.SemaphoreType.DMA((len(bounds),))],
    )
    return jax.jit(call)


def model_base_forward(x: jax.Array) -> jax.Array:
    """Pallas 'forward' for Model_Base: identity pass-through (any shape/dtype)."""
    if x.size == 0:
        # Nothing to copy; a zero-byte DMA is not launchable.
        return x

    orig_shape = x.shape
    if x.ndim == 0:
        x = x.reshape(1)

    n_bytes = x.size * jnp.dtype(x.dtype).itemsize
    n_chunks = 1 if n_bytes < _CHUNK_THRESHOLD_BYTES else _MAX_DMA_CHUNKS

    y = _build_identity(x.shape, x.dtype.name, n_chunks)(x)
    return y.reshape(orig_shape)


if __name__ == "__main__":
    key = jax.random.PRNGKey(0)

    # Small NCHW input consistent with a conv-style module interface.
    x = jax.random.normal(key, (2, 4, 16, 16), dtype=jnp.float32)
    y = model_base_forward(x)
    jax.block_until_ready(y)
    assert y.shape == x.shape and y.dtype == x.dtype
    assert bool(jnp.allclose(y, x)), "identity pass-through mismatch (f32 NCHW)"

    # Ragged / odd shape + narrow dtype: no padding or extra HBM passes needed.
    x2 = jax.random.normal(jax.random.PRNGKey(1), (3, 5, 7), dtype=jnp.bfloat16)
    y2 = model_base_forward(x2)
    jax.block_until_ready(y2)
    assert y2.shape == x2.shape and y2.dtype == x2.dtype
    assert bool(jnp.all(y2 == x2)), "identity pass-through mismatch (bf16 ragged)"

    # Large enough to exercise the multi-chunk concurrent-DMA path (1 MiB).
    x3 = jax.random.normal(jax.random.PRNGKey(2), (256, 1024), dtype=jnp.float32)
    y3 = model_base_forward(x3)
    jax.block_until_ready(y3)
    assert y3.shape == x3.shape and y3.dtype == x3.dtype
    assert bool(jnp.allclose(y3, x3)), "identity pass-through mismatch (chunked)"

    print("KERNEL_OK")
</pallas_src>

<mosaic_0001>
module attributes {stable_mosaic.version = 11 : i64} {
  func.func @kernel(%arg0: memref<2x4x16x16xf32, #tpu.memory_space<any>>, %arg1: memref<2x4x16x16xf32, #tpu.memory_space<any>>, %arg2: memref<1x!tpu.dma_semaphore, #tpu.memory_space<semaphore_mem>>) attributes {dimension_semantics = [], scalar_prefetch = 0 : i64, scratch_operands = 1 : i64, tpu.core_type = #tpu.core_type<tc>} {
    %c0_i32 = arith.constant 0 : i32
    %c0_i32_0 = arith.constant 0 : i32
    %c0_i32_1 = arith.constant 0 : i32
    %c0_i32_2 = arith.constant 0 : i32
    %c0_i32_3 = arith.constant 0 : i32
    %0 = tpu.memref_slice %arg0[%c0_i32_0, %c0_i32_1, %c0_i32_2, %c0_i32_3] : memref<2x4x16x16xf32, #tpu.memory_space<any>> -> memref<2x4x16x16xf32, #tpu.memory_space<any>>
    %c0_i32_4 = arith.constant 0 : i32
    %c0_i32_5 = arith.constant 0 : i32
    %c0_i32_6 = arith.constant 0 : i32
    %c0_i32_7 = arith.constant 0 : i32
    %1 = tpu.memref_slice %arg1[%c0_i32_4, %c0_i32_5, %c0_i32_6, %c0_i32_7] : memref<2x4x16x16xf32, #tpu.memory_space<any>> -> memref<2x4x16x16xf32, #tpu.memory_space<any>>
    %2 = tpu.memref_slice %arg2[%c0_i32] : memref<1x!tpu.dma_semaphore, #tpu.memory_space<semaphore_mem>> -> memref<1x!tpu.dma_semaphore, #tpu.memory_space<semaphore_mem>>
    %3 = tpu.memref_squeeze %2 : memref<1x!tpu.dma_semaphore, #tpu.memory_space<semaphore_mem>> -> memref<!tpu.dma_semaphore, #tpu.memory_space<semaphore_mem>>
    tpu.enqueue_dma source(%0 : memref<2x4x16x16xf32, #tpu.memory_space<any>>) target(%1 : memref<2x4x16x16xf32, #tpu.memory_space<any>>) target_semaphore(%3 : memref<!tpu.dma_semaphore, #tpu.memory_space<semaphore_mem>>)
    %c0_i32_8 = arith.constant 0 : i32
    %c0_i32_9 = arith.constant 0 : i32
    %c0_i32_10 = arith.constant 0 : i32
    %c0_i32_11 = arith.constant 0 : i32
    %c0_i32_12 = arith.constant 0 : i32
    %4 = tpu.memref_slice %arg0[%c0_i32_9, %c0_i32_10, %c0_i32_11, %c0_i32_12] : memref<2x4x16x16xf32, #tpu.memory_space<any>> -> memref<2x4x16x16xf32, #tpu.memory_space<any>>
    %c0_i32_13 = arith.constant 0 : i32
    %c0_i32_14 = arith.constant 0 : i32
    %c0_i32_15 = arith.constant 0 : i32
    %c0_i32_16 = arith.constant 0 : i32
    %5 = tpu.memref_slice %arg1[%c0_i32_13, %c0_i32_14, %c0_i32_15, %c0_i32_16] : memref<2x4x16x16xf32, #tpu.memory_space<any>> -> memref<2x4x16x16xf32, #tpu.memory_space<any>>
    %6 = tpu.memref_slice %arg2[%c0_i32_8] : memref<1x!tpu.dma_semaphore, #tpu.memory_space<semaphore_mem>> -> memref<1x!tpu.dma_semaphore, #tpu.memory_space<semaphore_mem>>
    %7 = tpu.memref_squeeze %6 : memref<1x!tpu.dma_semaphore, #tpu.memory_space<semaphore_mem>> -> memref<!tpu.dma_semaphore, #tpu.memory_space<semaphore_mem>>
    tpu.wait_dma2 semaphore(%7 : memref<!tpu.dma_semaphore, #tpu.memory_space<semaphore_mem>>) src(%4 : memref<2x4x16x16xf32, #tpu.memory_space<any>>) dst(%5 : memref<2x4x16x16xf32, #tpu.memory_space<any>>)
    return
  }
}

</mosaic_0001>

<llo_original>
// kernel: tpu_custom_call.1
$region0: #{tpu_custom_call.1}
  #allocation0 [shape = 'u32[]', space=smem, size = 0x4, offset = 0x4, fixed_abs, tag = 'smem constant byte address 0x4 - core index']
  #allocation1 [shape = 'u32[144,128]{1,0:T(1,128)}', space=vmem, size = 0x12000, scoped, tag = 'internal scratch']
  #allocation2 [shape = 's32[1]{0}', space=sflag, size = 0x4, scoped, tag = 'scratch operand']
  #allocation3 [shape = 's32[]', space=sflag, size = 0x4, offset = 0, fixed_abs, tag = 'sflag constant byte address 0x0 - dummy sync flag']
  #allocation4 [shape = 'u32[0]{0}', space=smem, size = 0, offset = 0, fixed_abs, tag = 'smem constant byte address 0x0 - null']
  %s0 = inlined_call_operand.hbm [shape: f32[2,4,16,16], index: 0, kind: input, shape index: {}]
  %s1 = inlined_call_operand.hbm [shape: f32[2,4,16,16], index: 1, kind: output, shape index: {}]
  %s2 = sld [smem:[#allocation0]]
  $region2: #{tpu_custom_call.1} parent=0
    _
  %s4 = ssub.s32 1, %s2
  %s5 = scalar_select 0, %s4, %s2
  %s7 = sshll.u32 1, 14
  %s8 = sxor.u32 4294967295, %s7
  %s11 = sshll.u32 3, 24
  %s12 = sxor.u32 4294967295, %s11
  %s13 = sand.u32 0, %s12
  %s15 = sor.u32 %s13, 0
  %18 = dma.general %s0, 2048, %s1, [#allocation2], [#allocation3], [#allocation4], %s15, 0
  %s19 = smul.u32 2, 4
  %s20 = smul.u32 %s19, 16
  %s21 = smul.u32 %s20, 1
  %s22 = sshll.u32 %s21, 4
  %23 = dma.done [#allocation2], %s22
  %24 = vsyncmov [#allocation2]
  %s25 = vpop.sfrf %24
  %p26 = scmp.eq.s32.totalorder %s25, 0
  %p27 = pneg %p26
  %29 = shalt.err (%p27)

</llo_original>
